<compile_context>
chip_gen: v7x
topology: tpu7x:2x2x1
jax: 0.10.0
libtpu: 0.0.40
codegen_flags: <defaults>
</compile_context>

<pallas_src>
import math

import jax
import jax.numpy as jnp
from jax.experimental import pallas as pl
from jax.experimental.pallas import tpu as pltpu


# ----------------------------------------------------------------------------
# chip-aware tiling helpers
# ----------------------------------------------------------------------------
def _tpu_big_vmem() -> bool:
    """True on 128-MiB-VMEM chips (v5e/v6e); False on v7x (64 MiB) or unknown."""
    try:
        kind = jax.devices()[0].device_kind.lower()
    except Exception:
        return False
    return "7" not in kind


def _max_time_tile() -> int:
    # v5e/v6e: bigger tiles amortize the ~0.35us per-step overhead.
    # v7x: keep the double-buffered 12-stream working set well inside 64 MiB.
    return 1024 if _tpu_big_vmem() else 512


def _vmem_limit_bytes() -> int:
    return (64 if _tpu_big_vmem() else 32) * 1024 * 1024


def _pick_time_tile(batch: int, t: int, max_tile: int) -> int:
    """Largest legal time tile; for batch == 1 keep >= 2 grid blocks so both
    v7x TensorCores receive work along the 'parallel' time axis."""
    tt = t if t <= max_tile else max_tile
    if batch == 1 and t >= 32:
        half = ((t + 1) // 2 + 15) // 16 * 16          # multiple of 16, < t
        if half < t:
            tt = min(tt, half)
    return tt


# ----------------------------------------------------------------------------
# Pallas kernel 1: inverse-mel projections + filter-kernel magnitudes
#   blocks: (TT, C) @ (C, H) -> (TT, H), H = n_fft//2 (lane-dense)
# ----------------------------------------------------------------------------
def _make_spectral_kernel(take_log: bool):
    def kernel(per_ref, vt_ref, wper_t_ref, wper_sum_ref, wenv_t_ref,
               kimp_ref, knoi_ref):
        per = per_ref[0]                                   # (TT, Dp)
        vt = vt_ref[0]                                     # (TT, n_mels)
        vtl = jnp.dot(vt, wenv_t_ref[...], preferred_element_type=jnp.float32)
        pimp = jnp.dot(per, wper_t_ref[...], preferred_element_type=jnp.float32)
        # w_per @ (1 - p) == rowsum(w_per) - w_per @ p   (saves one MXU matmul)
        pnoi = wper_sum_ref[...] - pimp                    # (1, H) broadcast
        kimp = pimp * vtl
        knoi = pnoi * vtl
        if take_log:
            # min-phase path: fuse log(max(.,1e-7)) (EUP; free in HBM-bound kernel)
            kimp = jnp.log(jnp.maximum(kimp, 1e-7))
            knoi = jnp.log(jnp.maximum(knoi, 1e-7))
        kimp_ref[0] = kimp.astype(kimp_ref.dtype)
        knoi_ref[0] = knoi.astype(knoi_ref.dtype)
    return kernel


def spectral_kernels(periodicity, vocal_tract, w_per, w_env, *, n_fft,
                     take_log, out_dtype):
    """periodicity (B, Dp, T), vocal_tract (B, n_mels, T), weights (fft_bin, C).
    Returns (kimp, knoi) for the MAIN bins only, time-major (B, T, n_fft//2).
    If take_log, outputs are log-magnitudes (min-phase path)."""
    B, Dp, T = periodicity.shape
    n_mels = vocal_tract.shape[1]
    H = n_fft // 2

    per_tl = jnp.transpose(periodicity, (0, 2, 1)).astype(jnp.float32)   # small
    vt_tl = jnp.transpose(vocal_tract, (0, 2, 1)).astype(jnp.float32)    # small
    w_per_t = jnp.transpose(w_per[:H]).astype(jnp.float32)               # (Dp, H)
    w_env_t = jnp.transpose(w_env[:H]).astype(jnp.float32)               # (n_mels, H)
    w_per_sum = jnp.sum(w_per_t, axis=0, keepdims=True)                  # (1, H)

    TT = _pick_time_tile(B, T, _max_time_tile())
    grid = (B, pl.cdiv(T, TT))
    itemsize = jnp.dtype(out_dtype).itemsize
    cost = pl.CostEstimate(
        flops=int(2 * B * T * H * (Dp + n_mels) + 3 * B * T * H),
        transcendentals=int(2 * B * T * H) if take_log else 0,
        bytes_accessed=int(4 * (B * T * (Dp + n_mels) + H * (Dp + n_mels + 1))
                           + 2 * B * T * H * itemsize),
    )
    out_shape = (
        jax.ShapeDtypeStruct((B, T, H), out_dtype),
        jax.ShapeDtypeStruct((B, T, H), out_dtype),
    )
    return pl.pallas_call(
        _make_spectral_kernel(take_log),
        out_shape=out_shape,
        grid=grid,
        in_specs=[
            pl.BlockSpec((1, TT, Dp), lambda b, t: (b, t, 0)),
            pl.BlockSpec((1, TT, n_mels), lambda b, t: (b, t, 0)),
            pl.BlockSpec((Dp, H), lambda b, t: (0, 0)),
            pl.BlockSpec((1, H), lambda b, t: (0, 0)),
            pl.BlockSpec((n_mels, H), lambda b, t: (0, 0)),
        ],
        out_specs=[
            pl.BlockSpec((1, TT, H), lambda b, t: (b, t, 0)),
            pl.BlockSpec((1, TT, H), lambda b, t: (b, t, 0)),
        ],
        compiler_params=pltpu.CompilerParams(
            dimension_semantics=("parallel", "parallel"),
            vmem_limit_bytes=_vmem_limit_bytes()),
        cost_estimate=cost,
    )(per_tl, vt_tl, w_per_t, w_per_sum, w_env_t)


# ----------------------------------------------------------------------------
# Pallas kernel 2: complex STFT combination on the MAIN bins (frames 1..T)
#   imp' = imp + noi * mask          (unvoiced substitution)
#   voi  = (imp' * kernel_imp + noi * kernel_noi) * scale
# ----------------------------------------------------------------------------
def _combine_kernel_minphase(scale_ref, ire_ref, iim_ref, nre_ref, nim_ref,
                             kir_ref, kii_ref, knr_ref, kni_ref, mask_ref,
                             vre_ref, vim_ref):
    s = scale_ref[0]                     # SMEM scalar
    m = mask_ref[0]                      # (TF, 1) -> broadcasts over bins
    nr = nre_ref[0]
    ni = nim_ref[0]
    ir = ire_ref[0] + nr * m
    ii = iim_ref[0] + ni * m
    kr = kir_ref[0].astype(jnp.float32)          # bf16 streams, f32 compute
    ki = kii_ref[0].astype(jnp.float32)
    k2r = knr_ref[0].astype(jnp.float32)
    k2i = kni_ref[0].astype(jnp.float32)
    vre_ref[0] = (ir * kr - ii * ki + nr * k2r - ni * k2i) * s
    vim_ref[0] = (ir * ki + ii * kr + nr * k2i + ni * k2r) * s


def _combine_kernel_realkern(scale_ref, ire_ref, iim_ref, nre_ref, nim_ref,
                             kr_ref, k2r_ref, mask_ref, vre_ref, vim_ref):
    # min_phase=False: filter spectra are real -> no imaginary filter streams.
    s = scale_ref[0]
    m = mask_ref[0]
    nr = nre_ref[0]
    ni = nim_ref[0]
    ir = ire_ref[0] + nr * m
    ii = iim_ref[0] + ni * m
    kr = kr_ref[0].astype(jnp.float32)
    k2r = k2r_ref[0].astype(jnp.float32)
    vre_ref[0] = (ir * kr + nr * k2r) * s
    vim_ref[0] = (ii * kr + ni * k2r) * s


def combine_stft(imp_re, imp_im, noi_re, noi_im, kernels, mask, scale, *, min_phase):
    """All tensor inputs/outputs are (B, F, H) with H = n_fft//2 (lane-dense);
    `kernels` is (kir,kii,knr,kni) bf16 when min_phase else (kimp,knoi) bf16."""
    B, F, H = imp_re.shape
    TF = _pick_time_tile(B, F, _max_time_tile())
    grid = (B, pl.cdiv(F, TF))
    blk = pl.BlockSpec((1, TF, H), lambda b, t: (b, t, 0))
    mblk = pl.BlockSpec((1, TF, 1), lambda b, t: (b, t, 0))
    sblk = pl.BlockSpec(memory_space=pltpu.MemorySpace.SMEM)
    nk = len(kernels)
    kernel_fn = _combine_kernel_minphase if min_phase else _combine_kernel_realkern
    cost = pl.CostEstimate(
        flops=int((12 + 4 * nk) * B * F * H),
        transcendentals=0,
        bytes_accessed=int(B * F * H * (4 * 6 + 2 * nk) + 4 * B * F),
    )
    out_shape = (
        jax.ShapeDtypeStruct((B, F, H), jnp.float32),
        jax.ShapeDtypeStruct((B, F, H), jnp.float32),
    )
    return pl.pallas_call(
        kernel_fn,
        out_shape=out_shape,
        grid=grid,
        in_specs=[sblk] + [blk] * 4 + [blk] * nk + [mblk],
        out_specs=[blk, blk],
        compiler_params=pltpu.CompilerParams(
            dimension_semantics=("parallel", "parallel"),
            vmem_limit_bytes=_vmem_limit_bytes()),
        cost_estimate=cost,
    )(scale, imp_re, imp_im, noi_re, noi_im, *kernels, mask)


# ----------------------------------------------------------------------------
# Plain-JAX glue (deterministic parameter init, DSP helpers)
# ----------------------------------------------------------------------------
def _hz_to_mel(f):
    return 2595.0 * jnp.log10(1.0 + f / 700.0)


def _mel_to_hz(m):
    return 700.0 * (jnp.power(10.0, m / 2595.0) - 1.0)


def mel_filterbank(n_mels, fft_bin, sample_rate):
    """Triangular mel filterbank, shape (n_mels, fft_bin)."""
    f_min, f_max = 0.0, sample_rate / 2.0
    mels = jnp.linspace(_hz_to_mel(f_min), _hz_to_mel(f_max), n_mels + 2)
    hz = _mel_to_hz(mels)
    bins = hz / (sample_rate / 2.0) * (fft_bin - 1)
    freqs = jnp.arange(fft_bin, dtype=jnp.float32)[None, :]
    left = bins[:-2][:, None]
    center = bins[1:-1][:, None]
    right = bins[2:][:, None]
    up = (freqs - left) / jnp.maximum(center - left, 1e-5)
    down = (right - freqs) / jnp.maximum(right - center, 1e-5)
    return jnp.clip(jnp.minimum(up, down), 0.0, 1.0)


def inverse_mel_weight(fft_bin, n_mels, sample_rate):
    """Deterministic InverseMelScale weight (fft_bin, n_mels): normalized FB transpose."""
    fb = mel_filterbank(n_mels, fft_bin, sample_rate)          # (n_mels, fft_bin)
    norm = jnp.maximum(fb.sum(axis=1, keepdims=True), 1e-8)
    return (fb / norm).T.astype(jnp.float32)                   # (fft_bin, n_mels)


def hann_window(n_fft):
    n = jnp.arange(n_fft, dtype=jnp.float32)
    return 0.5 * (1.0 - jnp.cos(2.0 * jnp.pi * n / n_fft))      # periodic, like torch


def upsample_linear(x, scale):
    """F.interpolate(mode='linear', align_corners=False) on (B, T) -> (B, T*scale)."""
    B, T = x.shape
    out_t = T * scale
    pos = (jnp.arange(out_t, dtype=jnp.float32) + 0.5) / scale - 0.5
    pos = jnp.clip(pos, 0.0, T - 1.0)
    lo = jnp.floor(pos).astype(jnp.int32)
    hi = jnp.minimum(lo + 1, T - 1)
    frac = pos - lo.astype(jnp.float32)
    return x[:, lo] * (1.0 - frac) + x[:, hi] * frac


def impulse_train_from_upsampled(f0_up, sample_rate):
    """Unit impulses at phase wraps of the instantaneous frequency."""
    phase = jnp.cumsum(f0_up / sample_rate, axis=1)
    wraps = jnp.floor(phase)
    prev = jnp.concatenate([jnp.zeros_like(wraps[:, :1]), wraps[:, :-1]], axis=1)
    return (wraps > prev).astype(jnp.float32)


def stft_frames(x, n_fft, hop, window, frame_start, num_frames):
    """Centered STFT (reflect pad) of frames [frame_start, frame_start+num_frames).
    Returns the complex spectrum (B, num_frames, n_fft//2 + 1), time-major.
    Framing uses hop-sized chunk reshapes (no XLA gather) when hop | n_fft."""
    pad = n_fft // 2
    xp = jnp.pad(x, ((0, 0), (pad, pad)), mode="reflect")
    B = x.shape[0]
    if n_fft % hop == 0 and xp.shape[1] % hop == 0:
        r = n_fft // hop
        chunks = xp.reshape(B, -1, hop)
        pieces = [chunks[:, frame_start + c: frame_start + c + num_frames, :]
                  for c in range(r)]
        frames = jnp.concatenate(pieces, axis=-1)              # (B, F, n_fft)
    else:
        # TODO(synk): gather fallback for hop that does not divide n_fft
        idx = (jnp.arange(num_frames) + frame_start)[:, None] * hop \
            + jnp.arange(n_fft)[None, :]
        frames = xp[:, idx]
    frames = frames * window[None, None, :]
    return jnp.fft.rfft(frames, axis=-1)                        # complex64


def istft_from_shifted_frames(vre, vim, n_fft, hop, window):
    """torch.istft(center=True) equivalent where the supplied frames are frames
    1..T of a (T+1)-frame spectrogram whose frame 0 is exactly zero.  Output
    length T*hop.  Overlap-add via static contiguous slice adds (no scatter)."""
    B, T, _ = vre.shape
    frames = jnp.fft.irfft(vre + 1j * vim, n=n_fft, axis=-1) * window[None, None, :]
    pad = n_fft // 2
    total = T * hop + n_fft
    if n_fft % hop == 0:
        r = n_fft // hop
        nchunks = T + r                                         # nchunks*hop == total
        wf = frames.reshape(B, T, r, hop)
        out = jnp.zeros((B, nchunks, hop), dtype=frames.dtype)
        for c in range(r):
            out = out.at[:, 1 + c: 1 + c + T, :].add(wf[:, :, c, :])
        wsq = (window * window).reshape(r, hop)
        wsum = jnp.zeros((nchunks, hop), dtype=frames.dtype)
        for c in range(r):
            wsum = wsum.at[c: c + T + 1, :].add(jnp.broadcast_to(wsq[c], (T + 1, hop)))
        out = out.reshape(B, nchunks * hop)
        wsum = wsum.reshape(nchunks * hop)
    else:
        # TODO(synk): scatter fallback for hop that does not divide n_fft
        idx = ((jnp.arange(T)[:, None] + 1) * hop + jnp.arange(n_fft)[None, :]).reshape(-1)
        out = jnp.zeros((B, total), dtype=frames.dtype).at[:, idx].add(frames.reshape(B, -1))
        widx = (jnp.arange(T + 1)[:, None] * hop + jnp.arange(n_fft)[None, :]).reshape(-1)
        wsum = jnp.zeros((total,), dtype=frames.dtype).at[widx].add(
            jnp.tile(window * window, T + 1))
    return out[:, pad: pad + T * hop] / jnp.maximum(wsum[pad: pad + T * hop], 1e-11)


def minimum_phase_reim(logmag_main, logmag_nyq, n_fft, kern_dtype):
    """Minimum-phase spectrum from log-magnitude via the real cepstrum.
    Inputs: lane-dense main bins (B, T, n_fft//2) + Nyquist column (B, T).
    Returns (re_main, im_main) in kern_dtype and the f32 Nyquist (re, im)."""
    H = n_fft // 2
    logmag = jnp.concatenate([logmag_main, logmag_nyq[..., None]], axis=-1)
    cep = jnp.fft.irfft(logmag, n=n_fft, axis=-1)               # (B, T, n_fft)
    w = jnp.zeros((n_fft,), jnp.float32)
    w = w.at[0].set(1.0).at[n_fft // 2].set(1.0).at[1:n_fft // 2].set(2.0)
    spec = jnp.fft.rfft(cep * w[None, None, :], n=n_fft, axis=-1)
    a = jnp.real(spec)
    b = jnp.imag(spec)
    ea = jnp.exp(a)
    re = ea * jnp.cos(b)
    im = ea * jnp.sin(b)
    return (re[..., :H].astype(kern_dtype), im[..., :H].astype(kern_dtype),
            re[..., H].astype(jnp.float32), im[..., H].astype(jnp.float32))


# ----------------------------------------------------------------------------
# Full forward pass
# ----------------------------------------------------------------------------
def subtractive_vocoder_forward(f0, periodicity, vocal_tract, *,
                                w_per, w_env, window,
                                sample_rate, hop_length, n_fft,
                                noise_key, min_phase=True,
                                vocal_cord=None, reverb=None):
    in_dtype = periodicity.dtype
    f0 = f0.astype(jnp.float32)
    window = window.astype(jnp.float32)
    B, T = f0.shape
    H = n_fft // 2

    # source signals (no-grad block in torch)
    f0_up = upsample_linear(f0, hop_length)                     # (B, T*hop)
    imp_scale = jax.lax.rsqrt(jnp.maximum(f0_up, 20.0)) * math.sqrt(sample_rate)
    imp = impulse_train_from_upsampled(f0_up, sample_rate) * imp_scale
    noi = jax.random.uniform(noise_key, imp.shape, dtype=jnp.float32)

    # TODO(synk): optional vocal_cord grouped-conv branch not implemented (input is None here).
    # TODO(synk): optional reverb fft_convolve branch not implemented (input is None here).

    # Frame 0 of the torch result is exactly zero (left-padded filter kernels),
    # so only frames 1..T are synthesised — F.pad(kernel,(1,0)) / F.pad(f0,(1,0))
    # fold away.  STFTs split into lane-dense main bins + the Nyquist column.
    imp_spec = stft_frames(imp, n_fft, hop_length, window, 1, T)   # (B, T, H+1) c64
    noi_spec = stft_frames(noi, n_fft, hop_length, window, 1, T)
    imp_re, imp_im = jnp.real(imp_spec[..., :H]), jnp.imag(imp_spec[..., :H])
    noi_re, noi_im = jnp.real(noi_spec[..., :H]), jnp.imag(noi_spec[..., :H])
    imp_re_n, imp_im_n = jnp.real(imp_spec[..., H]), jnp.imag(imp_spec[..., H])
    noi_re_n, noi_im_n = jnp.real(noi_spec[..., H]), jnp.imag(noi_spec[..., H])

    # --- Pallas: InverseMelScale projections + filter magnitudes (main bins) ---
    spec_dtype = jnp.float32 if min_phase else jnp.bfloat16
    kimp_main, knoi_main = spectral_kernels(
        periodicity, vocal_tract, w_per, w_env,
        n_fft=n_fft, take_log=min_phase, out_dtype=spec_dtype)

    # Nyquist column of the filter magnitudes (tiny JAX glue).
    per32 = periodicity.astype(jnp.float32)
    vt32 = vocal_tract.astype(jnp.float32)
    w_per_nyq = w_per[H].astype(jnp.float32)                     # (Dp,)
    w_env_nyq = w_env[H].astype(jnp.float32)                     # (n_mels,)
    p_nyq = jnp.einsum("bdt,d->bt", per32, w_per_nyq)            # (B, T)
    e_nyq = jnp.einsum("bdt,d->bt", vt32, w_env_nyq)
    kimp_nyq = p_nyq * e_nyq
    knoi_nyq = (jnp.sum(w_per_nyq) - p_nyq) * e_nyq

    # unvoiced (f0 < 20 Hz) -> substitute noise spectrum into the impulse branch
    mask_bt = (f0 < 20.0).astype(jnp.float32)                    # (B, T)
    mask = mask_bt[:, :, None]
    # torch: voi_stft *= n_fft * (window.sum()/n_fft) == window.sum()
    scale = jnp.sum(window).astype(jnp.float32)
    scale_smem = scale.reshape(1)                                # SMEM scalar

    if min_phase:
        kir, kii, kir_n, kii_n = minimum_phase_reim(
            kimp_main, jnp.log(jnp.maximum(kimp_nyq, 1e-7)), n_fft, jnp.bfloat16)
        knr, kni, knr_n, kni_n = minimum_phase_reim(
            knoi_main, jnp.log(jnp.maximum(knoi_nyq, 1e-7)), n_fft, jnp.bfloat16)
        # --- Pallas: complex combine (main bins) ---
        vre_main, vim_main = combine_stft(
            imp_re, imp_im, noi_re, noi_im, (kir, kii, knr, kni),
            mask, scale_smem, min_phase=True)
        # Nyquist bin in JAX (tiny)
        ir_n = imp_re_n + noi_re_n * mask_bt
        ii_n = imp_im_n + noi_im_n * mask_bt
        vre_n = (ir_n * kir_n - ii_n * kii_n + noi_re_n * knr_n - noi_im_n * kni_n) * scale
        vim_n = (ir_n * kii_n + ii_n * kir_n + noi_re_n * kni_n + noi_im_n * knr_n) * scale
    else:
        # real (magnitude-only) filter kernels: no imaginary filter streams
        vre_main, vim_main = combine_stft(
            imp_re, imp_im, noi_re, noi_im, (kimp_main, knoi_main),
            mask, scale_smem, min_phase=False)
        ir_n = imp_re_n + noi_re_n * mask_bt
        ii_n = imp_im_n + noi_im_n * mask_bt
        vre_n = (ir_n * kimp_nyq + noi_re_n * knoi_nyq) * scale
        vim_n = (ii_n * kimp_nyq + noi_im_n * knoi_nyq) * scale

    # re-attach the Nyquist bin only where the irfft needs full width
    vre = jnp.concatenate([vre_main, vre_n[..., None]], axis=-1)
    vim = jnp.concatenate([vim_main, vim_n[..., None]], axis=-1)

    voi = istft_from_shifted_frames(vre, vim, n_fft, hop_length, window)
    return voi.astype(in_dtype)


# ----------------------------------------------------------------------------
if __name__ == "__main__":
    # small config consistent with the module (scaled-down n_fft / sample_rate)
    B, T = 2, 16
    dim_periodicity, n_mels = 8, 32
    sample_rate, hop_length, n_fft = 8000, 64, 256
    fft_bin = n_fft // 2 + 1

    key = jax.random.PRNGKey(0)
    k_f0, k_uv, k_per, k_vt, k_noise = jax.random.split(key, 5)

    f0 = jax.random.uniform(k_f0, (B, T), minval=80.0, maxval=300.0)
    # a few unvoiced frames (f0 < 20) to exercise the noise-substitution mask
    f0 = f0 * (jax.random.uniform(k_uv, (B, T)) > 0.2).astype(jnp.float32)
    periodicity = jax.random.uniform(k_per, (B, dim_periodicity, T), dtype=jnp.float32)
    vocal_tract = jax.random.uniform(k_vt, (B, n_mels, T), dtype=jnp.float32)

    # deterministic "parameters" (InverseMelScale weights + hann window)
    w_per = inverse_mel_weight(fft_bin, dim_periodicity, sample_rate)
    w_env = inverse_mel_weight(fft_bin, n_mels, sample_rate)
    window = hann_window(n_fft)

    voi = subtractive_vocoder_forward(
        f0, periodicity, vocal_tract,
        w_per=w_per, w_env=w_env, window=window,
        sample_rate=sample_rate, hop_length=hop_length, n_fft=n_fft,
        noise_key=k_noise, min_phase=True,
        vocal_cord=None, reverb=None,
    )
    jax.block_until_ready(voi)
    assert voi.shape == (B, T * hop_length), voi.shape
    assert voi.dtype == jnp.float32
    assert bool(jnp.all(jnp.isfinite(voi)))
    print("KERNEL_OK")
</pallas_src>

<mosaic_0001>
module attributes {stable_mosaic.version = 11 : i64} {
  func.func @kernel(%arg0: i32, %arg1: i32, %arg2: memref<1x16x8xf32, #tpu.memory_space<vmem>>, %arg3: memref<1x16x32xf32, #tpu.memory_space<vmem>>, %arg4: memref<8x128xf32, #tpu.memory_space<vmem>>, %arg5: memref<1x128xf32, #tpu.memory_space<vmem>>, %arg6: memref<32x128xf32, #tpu.memory_space<vmem>>, %arg7: memref<1x16x128xf32, #tpu.memory_space<vmem>>, %arg8: memref<1x16x128xf32, #tpu.memory_space<vmem>>) attributes {dimension_semantics = [#tpu.dimension_semantics<parallel>, #tpu.dimension_semantics<parallel>], iteration_bounds = array<i64: 2, 1>, scalar_prefetch = 0 : i64, scratch_operands = 0 : i64, tpu.core_type = #tpu.core_type<tc>, window_params = [{transform_indices = @transform_0, window_bounds = array<i64: 1, 16, 8>}, {transform_indices = @transform_1, window_bounds = array<i64: 1, 16, 32>}, {pipeline_mode = #tpu.pipeline_mode<synchronous>, transform_indices = @transform_2, window_bounds = array<i64: 8, 128>}, {pipeline_mode = #tpu.pipeline_mode<synchronous>, transform_indices = @transform_3, window_bounds = array<i64: 1, 128>}, {pipeline_mode = #tpu.pipeline_mode<synchronous>, transform_indices = @transform_4, window_bounds = array<i64: 32, 128>}, {transform_indices = @transform_5, window_bounds = array<i64: 1, 16, 128>}, {transform_indices = @transform_6, window_bounds = array<i64: 1, 16, 128>}]} {
    %c0 = arith.constant 0 : index
    %c0_0 = arith.constant 0 : index
    %c0_1 = arith.constant 0 : index
    %0 = vector.load %arg2[%c0, %c0_0, %c0_1] : memref<1x16x8xf32, #tpu.memory_space<vmem>>, vector<1x16x8xf32>
    %1 = vector.shape_cast %0 : vector<1x16x8xf32> to vector<16x8xf32>
    %c0_2 = arith.constant 0 : index
    %c0_3 = arith.constant 0 : index
    %c0_4 = arith.constant 0 : index
    %2 = vector.load %arg3[%c0_2, %c0_3, %c0_4] : memref<1x16x32xf32, #tpu.memory_space<vmem>>, vector<1x16x32xf32>
    %3 = vector.shape_cast %2 : vector<1x16x32xf32> to vector<16x32xf32>
    %c0_5 = arith.constant 0 : index
    %c0_6 = arith.constant 0 : index
    %4 = vector.load %arg6[%c0_5, %c0_6] : memref<32x128xf32, #tpu.memory_space<vmem>>, vector<32x128xf32>
    %cst = arith.constant dense<0.000000e+00> : vector<16x128xf32>
    %5 = tpu.matmul %3, %4, %cst {dimension_numbers = #tpu.dot_dimension_numbers<[1], [0], [0], [1], [0, 0, 1, 1], [], []>} : vector<16x32xf32>, vector<32x128xf32>, vector<16x128xf32> -> vector<16x128xf32>
    %c0_7 = arith.constant 0 : index
    %c0_8 = arith.constant 0 : index
    %6 = vector.load %arg4[%c0_7, %c0_8] : memref<8x128xf32, #tpu.memory_space<vmem>>, vector<8x128xf32>
    %cst_9 = arith.constant dense<0.000000e+00> : vector<16x128xf32>
    %7 = tpu.matmul %1, %6, %cst_9 {dimension_numbers = #tpu.dot_dimension_numbers<[1], [0], [0], [1], [0, 0, 1, 1], [], []>} : vector<16x8xf32>, vector<8x128xf32>, vector<16x128xf32> -> vector<16x128xf32>
    %c0_10 = arith.constant 0 : index
    %c0_11 = arith.constant 0 : index
    %8 = vector.load %arg5[%c0_10, %c0_11] : memref<1x128xf32, #tpu.memory_space<vmem>>, vector<1x128xf32>
    %9 = vector.broadcast %8 : vector<1x128xf32> to vector<16x128xf32>
    %10 = arith.subf %9, %7 : vector<16x128xf32>
    %11 = arith.mulf %7, %5 : vector<16x128xf32>
    %12 = arith.mulf %10, %5 : vector<16x128xf32>
    %cst_12 = arith.constant 1.000000e-07 : f32
    %13 = vector.broadcast %cst_12 : f32 to vector<16x128xf32>
    %14 = arith.maximumf %11, %13 : vector<16x128xf32>
    %15 = math.log %14 : vector<16x128xf32>
    %cst_13 = arith.constant 1.000000e-07 : f32
    %16 = vector.broadcast %cst_13 : f32 to vector<16x128xf32>
    %17 = arith.maximumf %12, %16 : vector<16x128xf32>
    %18 = math.log %17 : vector<16x128xf32>
    %c0_14 = arith.constant 0 : index
    %c0_15 = arith.constant 0 : index
    %c0_16 = arith.constant 0 : index
    %19 = vector.load %arg7[%c0_14, %c0_15, %c0_16] : memref<1x16x128xf32, #tpu.memory_space<vmem>>, vector<1x16x128xf32>
    %20 = vector.shape_cast %19 : vector<1x16x128xf32> to vector<16x128xf32>
    %21 = vector.shape_cast %15 : vector<16x128xf32> to vector<1x16x128xf32>
    tpu.vector_store %arg7[%c0_14, %c0_15, %c0_16], %21 {strides = array<i32>} : memref<1x16x128xf32, #tpu.memory_space<vmem>>, vector<1x16x128xf32>,
    %c0_17 = arith.constant 0 : index
    %c0_18 = arith.constant 0 : index
    %c0_19 = arith.constant 0 : index
    %22 = vector.load %arg8[%c0_17, %c0_18, %c0_19] : memref<1x16x128xf32, #tpu.memory_space<vmem>>, vector<1x16x128xf32>
    %23 = vector.shape_cast %22 : vector<1x16x128xf32> to vector<16x128xf32>
    %24 = vector.shape_cast %18 : vector<16x128xf32> to vector<1x16x128xf32>
    tpu.vector_store %arg8[%c0_17, %c0_18, %c0_19], %24 {strides = array<i32>} : memref<1x16x128xf32, #tpu.memory_space<vmem>>, vector<1x16x128xf32>,
    return
  }
  func.func @transform_0(%arg0: i32, %arg1: i32) -> (i32, i32, i32) {
    %c0_i32 = arith.constant 0 : i32
    %c0_i32_0 = arith.constant 0 : i32
    return %arg0, %arg1, %c0_i32 : i32, i32, i32
  }
  func.func @transform_1(%arg0: i32, %arg1: i32) -> (i32, i32, i32) {
    %c0_i32 = arith.constant 0 : i32
    %c0_i32_0 = arith.constant 0 : i32
    return %arg0, %arg1, %c0_i32 : i32, i32, i32
  }
  func.func @transform_2(%arg0: i32, %arg1: i32) -> (i32, i32) {
    %c0_i32 = arith.constant 0 : i32
    %c0_i32_0 = arith.constant 0 : i32
    %c0_i32_1 = arith.constant 0 : i32
    return %c0_i32, %c0_i32_0 : i32, i32
  }
  func.func @transform_3(%arg0: i32, %arg1: i32) -> (i32, i32) {
    %c0_i32 = arith.constant 0 : i32
    %c0_i32_0 = arith.constant 0 : i32
    %c0_i32_1 = arith.constant 0 : i32
    return %c0_i32, %c0_i32_0 : i32, i32
  }
  func.func @transform_4(%arg0: i32, %arg1: i32) -> (i32, i32) {
    %c0_i32 = arith.constant 0 : i32
    %c0_i32_0 = arith.constant 0 : i32
    %c0_i32_1 = arith.constant 0 : i32
    return %c0_i32, %c0_i32_0 : i32, i32
  }
  func.func @transform_5(%arg0: i32, %arg1: i32) -> (i32, i32, i32) {
    %c0_i32 = arith.constant 0 : i32
    %c0_i32_0 = arith.constant 0 : i32
    return %arg0, %arg1, %c0_i32 : i32, i32, i32
  }
  func.func @transform_6(%arg0: i32, %arg1: i32) -> (i32, i32, i32) {
    %c0_i32 = arith.constant 0 : i32
    %c0_i32_0 = arith.constant 0 : i32
    return %arg0, %arg1, %c0_i32 : i32, i32, i32
  }
}

</mosaic_0001>

<llo_original>
// kernel: tpu_custom_call.1
$region0: #{tpu_custom_call.1}
  #allocation0 [shape = 'u32[]', space=smem, size = 0x4, offset = 0x4, fixed_abs, tag = 'smem constant byte address 0x4 - core index']
  #allocation1 [shape = 'u32[144,128]{1,0:T(1,128)}', space=vmem, size = 0x12000, scoped, tag = 'internal scratch']
  %s0 = inlined_call_operand.hbm [shape: f32[2,16,8], index: 0, kind: input, shape index: {}]
  %s1 = inlined_call_operand.hbm [shape: f32[2,16,32], index: 1, kind: input, shape index: {}]
  %s2 = inlined_call_operand.hbm [shape: f32[8,128], index: 2, kind: input, shape index: {}]
  %s3 = inlined_call_operand.hbm [shape: f32[1,128], index: 3, kind: input, shape index: {}]
  %s4 = inlined_call_operand.hbm [shape: f32[32,128], index: 4, kind: input, shape index: {}]
  %s5 = inlined_call_operand.hbm [shape: f32[2,16,128], index: 5, kind: output, shape index: {0}]
  %s6 = inlined_call_operand.hbm [shape: f32[2,16,128], index: 6, kind: output, shape index: {1}]
  %7 = xla_tuple %s5, %s6
  %s8 = sld [smem:[#allocation0]]
  $region81: #{tpu_custom_call.1} parent=0
    _
  %s10 = ssub.s32 1, %s8
  %s11 = scalar_select 0, %s10, %s8
  $region1: #{tpu_custom_call.1} parent=0
    #allocation2 [shape = 'u8[16384]{0}', space=vmem, size = 0x4000, scoped, tag = 'input window, operand 0']
    #allocation3 [shape = 's32[2]{0}', space=sflag, size = 0x8, scoped, tag = 'scoped memory for tpu_custom_call.1']
    #allocation4 [shape = 's32[2]{0}', space=sflag, size = 0x8, scoped, tag = 'scoped memory for tpu_custom_call.1']
    #allocation5 [shape = 'u8[16384]{0}', space=vmem, size = 0x4000, scoped, tag = 'input window, operand 1']
    #allocation6 [shape = 's32[2]{0}', space=sflag, size = 0x8, scoped, tag = 'scoped memory for tpu_custom_call.1']
    #allocation7 [shape = 'u8[4096]{0}', space=vmem, size = 0x1000, scoped, tag = 'input window, operand 2, single buffered']
    #allocation8 [shape = 'u8[512]{0}', space=vmem, size = 0x400, scoped, tag = 'input window, operand 3, single buffered']
    #allocation9 [shape = 's32[1]{0}', space=sflag, size = 0x4, scoped, tag = 'scoped memory for tpu_custom_call.1']
    #allocation10 [shape = 'u8[16384]{0}', space=vmem, size = 0x4000, scoped, tag = 'input window, operand 4, single buffered']
    #allocation11 [shape = 'u8[16384]{0}', space=vmem, size = 0x4000, scoped, tag = 'output window, operand 0']
    #allocation12 [shape = 'u8[16384]{0}', space=vmem, size = 0x4000, scoped, tag = 'output window, operand 1']
    #allocation13 [shape = 's32[2]{0}', space=sflag, size = 0x8, scoped, tag = 'scoped memory for tpu_custom_call.1']
    %12 = vsyncpa [#allocation3], 0
    %s13 = scalar_lea.sflag [#allocation3], 1
    %14 = vsyncpa %s13, 0
    %15 = vsyncpa [#allocation6], 0
    %s16 = scalar_lea.sflag [#allocation6], 1
    %17 = vsyncpa %s16, 0
    %18 = vsyncpa [#allocation9], 0
    %19 = vsyncpa [#allocation4], 0
    %s20 = scalar_lea.sflag [#allocation4], 1
    %21 = vsyncpa %s20, 0
    %22 = vsyncpa [#allocation13], 0
    %s23 = scalar_lea.sflag [#allocation13], 1
    %24 = vsyncpa %s23, 0
    loop: start=0, step=1, limit=4
    $region2: #{tpu_custom_call.1} parent=1 // loop_pre_header
      _
    $region3: #{tpu_custom_call.1} parent=1 // loop_header
      %s26 = sphi 0, %s30
      %p27 = scmp.ge.s32.totalorder %s26, 4
      %s33 = sphi 0, %s45
      %s34 = sphi 0, %s41
      %s35 = sphi 0, %s33
      %s36 = sphi 0, %s34
      %s37 = sphi 0, %s35
      %s38 = sphi 0, %s36
      %s50 = sphi 0, %s52
      %s53 = sphi 0, %s50
      %s54 = sphi 0, %s53
      %s70 = sphi 0, %s54
      %s78 = sphi 0, %s80
      %s81 = sphi 0, %s78
      %s82 = sphi 0, %s81
      %s98 = sphi 0, %s82
      %s102 = sphi 0, %s102
      %s104 = sphi 0, %s102
      %s105 = sphi 0, %s104
      %s119 = sphi 0, %s105
      %s123 = sphi 0, %s123
      %s125 = sphi 0, %s123
      %s126 = sphi 0, %s125
      %s140 = sphi 0, %s126
      %s144 = sphi 0, %s144
      %s146 = sphi 0, %s144
      %s147 = sphi 0, %s146
      %s161 = sphi 0, %s147
      %s169 = sphi 0, %s171
      %s172 = sphi 0, %s169
      %s173 = sphi 0, %s172
      %s189 = sphi 0, %s173
      %s197 = sphi 0, %s199
      %s200 = sphi 0, %s197
      %s201 = sphi 0, %s200
      %s217 = sphi 0, %s201
    $region4: #{tpu_custom_call.1} parent=1 // loop_header_branch
      %29 = sbr.rel (%p27) target = $region8
    $region5: #{tpu_custom_call.1} parent=1 // loop_body
      %s31 = ssub.s32 %s26, 1
      %s32 = ssub.s32 %s26, 2
      %s39 = sadd.s32 1, %s34
      %p40 = scmp.ge.s32.totalorder %s39, 1
      %s41 = scalar_select %p40, 0, %s39
      %s42 = sadd.s32 1, %s33
      %s43 = scalar_select %p40, %s42, %s33
      %p44 = scmp.ge.s32.totalorder %s43, 2
      %s45 = scalar_select %p44, 0, %s43
      %s46 = ssub.s32 %s33, %s45
      %s47 = ssub.s32 %s34, %s41
      %s48 = sor.u32 %s46, %s47
      %p49 = scmp.eq.s32.totalorder %s48, 0
      %s51 = sadd.s32 %s50, 1
      %s52 = scalar_select %p49, %s50, %s51
      %p55 = pneg %p49
      %p56 = scmp.eq.s32.totalorder %s26, 1
      %p57 = por %p55, %p56
      %p58 = scmp.ne.s32.totalorder %s50, %s53
      %p59 = scmp.eq.s32.totalorder %s26, 0
      %p60 = por %p58, %p59
      %p61 = scmp.ne.s32.totalorder %s50, %s53
      %p62 = scmp.eq.s32.totalorder %s31, 1
      %p63 = por %p61, %p62
      %p64 = scmp.ne.s32.totalorder %s53, %s54
      %p65 = scmp.eq.s32.totalorder %s31, 0
      %p66 = por %p64, %p65
      %p67 = scmp.ne.s32.totalorder %s53, %s54
      %p68 = scmp.eq.s32.totalorder %s32, 1
      %p69 = por %p67, %p68
      %p71 = scmp.ne.s32.totalorder %s54, %s70
      %p72 = scmp.eq.s32.totalorder %s32, 0
      %p73 = por %p71, %p72
      %s74 = ssub.s32 %s33, %s45
      %s75 = ssub.s32 %s34, %s41
      %s76 = sor.u32 %s74, %s75
      %p77 = scmp.eq.s32.totalorder %s76, 0
      %s79 = sadd.s32 %s78, 1
      %s80 = scalar_select %p77, %s78, %s79
      %p83 = pneg %p77
      %p84 = scmp.eq.s32.totalorder %s26, 1
      %p85 = por %p83, %p84
      %p86 = scmp.ne.s32.totalorder %s78, %s81
      %p87 = scmp.eq.s32.totalorder %s26, 0
      %p88 = por %p86, %p87
      %p89 = scmp.ne.s32.totalorder %s78, %s81
      %p90 = scmp.eq.s32.totalorder %s31, 1
      %p91 = por %p89, %p90
      %p92 = scmp.ne.s32.totalorder %s81, %s82
      %p93 = scmp.eq.s32.totalorder %s31, 0
      %p94 = por %p92, %p93
      %p95 = scmp.ne.s32.totalorder %s81, %s82
      %p96 = scmp.eq.s32.totalorder %s32, 1
      %p97 = por %p95, %p96
      %p99 = scmp.ne.s32.totalorder %s82, %s98
      %p100 = scmp.eq.s32.totalorder %s32, 0
      %p101 = por %p99, %p100
      %s103 = sadd.s32 %s102, 1
      %p106 = scmp.eq.s32.totalorder %s26, 1
      %p107 = scmp.ne.s32.totalorder %s102, %s104
      %p108 = scmp.eq.s32.totalorder %s26, 0
      %p109 = por %p107, %p108
      %p110 = scmp.ne.s32.totalorder %s102, %s104
      %p111 = scmp.eq.s32.totalorder %s31, 1
      %p112 = por %p110, %p111
      %p113 = scmp.ne.s32.totalorder %s104, %s105
      %p114 = scmp.eq.s32.totalorder %s31, 0
      %p115 = por %p113, %p114
      %p116 = scmp.ne.s32.totalorder %s104, %s105
      %p117 = scmp.eq.s32.totalorder %s32, 1
      %p118 = por %p116, %p117
      %p120 = scmp.ne.s32.totalorder %s105, %s119
      %p121 = scmp.eq.s32.totalorder %s32, 0
      %p122 = por %p120, %p121
      %s124 = sadd.s32 %s123, 1
      %p127 = scmp.eq.s32.totalorder %s26, 1
      %p128 = scmp.ne.s32.totalorder %s123, %s125
      %p129 = scmp.eq.s32.totalorder %s26, 0
      %p130 = por %p128, %p129
      %p131 = scmp.ne.s32.totalorder %s123, %s125
      %p132 = scmp.eq.s32.totalorder %s31, 1
      %p133 = por %p131, %p132
      %p134 = scmp.ne.s32.totalorder %s125, %s126
      %p135 = scmp.eq.s32.totalorder %s31, 0
      %p136 = por %p134, %p135
      %p137 = scmp.ne.s32.totalorder %s125, %s126
      %p138 = scmp.eq.s32.totalorder %s32, 1
      %p139 = por %p137, %p138
      %p141 = scmp.ne.s32.totalorder %s126, %s140
      %p142 = scmp.eq.s32.totalorder %s32, 0
      %p143 = por %p141, %p142
      %s145 = sadd.s32 %s144, 1
      %p148 = scmp.eq.s32.totalorder %s26, 1
      %p149 = scmp.ne.s32.totalorder %s144, %s146
      %p150 = scmp.eq.s32.totalorder %s26, 0
      %p151 = por %p149, %p150
      %p152 = scmp.ne.s32.totalorder %s144, %s146
      %p153 = scmp.eq.s32.totalorder %s31, 1
      %p154 = por %p152, %p153
      %p155 = scmp.ne.s32.totalorder %s146, %s147
      %p156 = scmp.eq.s32.totalorder %s31, 0
      %p157 = por %p155, %p156
      %p158 = scmp.ne.s32.totalorder %s146, %s147
      %p159 = scmp.eq.s32.totalorder %s32, 1
      %p160 = por %p158, %p159
      %p162 = scmp.ne.s32.totalorder %s147, %s161
      %p163 = scmp.eq.s32.totalorder %s32, 0
      %p164 = por %p162, %p163
      %s165 = ssub.s32 %s33, %s45
      %s166 = ssub.s32 %s34, %s41
      %s167 = sor.u32 %s165, %s166
      %p168 = scmp.eq.s32.totalorder %s167, 0
      %s170 = sadd.s32 %s169, 1
      %s171 = scalar_select %p168, %s169, %s170
      %p174 = pneg %p168
      %p175 = scmp.eq.s32.totalorder %s26, 1
      %p176 = por %p174, %p175
      %p177 = scmp.ne.s32.totalorder %s169, %s172
      %p178 = scmp.eq.s32.totalorder %s26, 0
      %p179 = por %p177, %p178
      %p180 = scmp.ne.s32.totalorder %s169, %s172
      %p181 = scmp.eq.s32.totalorder %s31, 1
      %p182 = por %p180, %p181
      %p183 = scmp.ne.s32.totalorder %s172, %s173
      %p184 = scmp.eq.s32.totalorder %s31, 0
      %p185 = por %p183, %p184
      %p186 = scmp.ne.s32.totalorder %s172, %s173
      %p187 = scmp.eq.s32.totalorder %s32, 1
      %p188 = por %p186, %p187
      %p190 = scmp.ne.s32.totalorder %s173, %s189
      %p191 = scmp.eq.s32.totalorder %s32, 0
      %p192 = por %p190, %p191
      %s193 = ssub.s32 %s33, %s45
      %s194 = ssub.s32 %s34, %s41
      %s195 = sor.u32 %s193, %s194
      %p196 = scmp.eq.s32.totalorder %s195, 0
      %s198 = sadd.s32 %s197, 1
      %s199 = scalar_select %p196, %s197, %s198
      %p202 = pneg %p196
      %p203 = scmp.eq.s32.totalorder %s26, 1
      %p204 = por %p202, %p203
      %p205 = scmp.ne.s32.totalorder %s197, %s200
      %p206 = scmp.eq.s32.totalorder %s26, 0
      %p207 = por %p205, %p206
      %p208 = scmp.ne.s32.totalorder %s197, %s200
      %p209 = scmp.eq.s32.totalorder %s31, 1
      %p210 = por %p208, %p209
      %p211 = scmp.ne.s32.totalorder %s200, %s201
      %p212 = scmp.eq.s32.totalorder %s31, 0
      %p213 = por %p211, %p212
      %p214 = scmp.ne.s32.totalorder %s200, %s201
      %p215 = scmp.eq.s32.totalorder %s32, 1
      %p216 = por %p214, %p215
      %p218 = scmp.ne.s32.totalorder %s201, %s217
      %p219 = scmp.eq.s32.totalorder %s32, 0
      %p220 = por %p218, %p219
      %p221 = scmp.le.s32.totalorder 1, %s26
      %p222 = scmp.lt.s32.totalorder %s26, 3
      %p223 = pnand %p221, %p222
      %p224 = pneg %p223
      // Predicated region
      $region9: #{tpu_custom_call.1} parent=5 // pred_check
        _
      $region10: #{tpu_custom_call.1} parent=5 // pred_check_branch
        %226 = sbr.rel (%p223) target = $region12
      $region11: #{tpu_custom_call.1} parent=5 // pred_region
        %s227 = ssub.s32 %s26, 1
        // Predicated region
        $region13: #{tpu_custom_call.1} parent=11 // pred_check
          %p228 = pneg %p115
        $region14: #{tpu_custom_call.1} parent=11 // pred_check_branch
          %230 = sbr.rel (%p228) target = $region16
        $region15: #{tpu_custom_call.1} parent=11 // pred_region
          %s232 = ssub.s32 128, 128
          %233 = vsyncadd [#allocation6], %s232
          %s235 = sshll.u32 [#allocation7], 4
          %s236 = int_to_ptr.vmem [resolvable:$true] %s235
          %238 = dma.hbm_to_vmem [thread:$0]  %s2, 128, %s236, [#allocation6]
        $region16: #{tpu_custom_call.1} parent=11 // pred_fallthru
          _
        // Predicated region
        $region17: #{tpu_custom_call.1} parent=11 // pred_check
          %p239 = pneg %p136
        $region18: #{tpu_custom_call.1} parent=11 // pred_check_branch
          %241 = sbr.rel (%p239) target = $region20
        $region19: #{tpu_custom_call.1} parent=11 // pred_region
          %s243 = ssub.s32 16, 16
          %244 = vsyncadd [#allocation9], %s243
          %s246 = sshll.u32 [#allocation8], 4
          %s247 = int_to_ptr.vmem [resolvable:$true] %s246
          %249 = dma.hbm_to_vmem [thread:$0]  %s3, 16, %s247, [#allocation9]
        $region20: #{tpu_custom_call.1} parent=11 // pred_fallthru
          _
        // Predicated region
        $region21: #{tpu_custom_call.1} parent=11 // pred_check
          %p250 = pneg %p157
        $region22: #{tpu_custom_call.1} parent=11 // pred_check_branch
          %252 = sbr.rel (%p250) target = $region24
        $region23: #{tpu_custom_call.1} parent=11 // pred_region
          %s254 = ssub.s32 512, 512
          %255 = vsyncadd [#allocation9], %s254
          %s256 = sshll.u32 [#allocation10], 4
          %s257 = int_to_ptr.vmem [resolvable:$true] %s256
          %262 = dma.hbm_to_vmem [thread:$0]  %s4, 512, %s257, [#allocation9], 128, 128, 8
        $region24: #{tpu_custom_call.1} parent=11 // pred_fallthru
          _
      $region12: #{tpu_custom_call.1} parent=5 // pred_fallthru
        _
      %p263 = scmp.lt.s32.totalorder %s26, 2
      // Predicated region
      $region25: #{tpu_custom_call.1} parent=5 // pred_check
        %p264 = pneg %p263
      $region26: #{tpu_custom_call.1} parent=5 // pred_check_branch
        %266 = sbr.rel (%p264) target = $region28
      $region27: #{tpu_custom_call.1} parent=5 // pred_region
        // Predicated region
        $region29: #{tpu_custom_call.1} parent=27 // pred_check
          %p267 = pneg %p60
        $region30: #{tpu_custom_call.1} parent=27 // pred_check_branch
          %269 = sbr.rel (%p267) target = $region32
        $region31: #{tpu_custom_call.1} parent=27 // pred_region
          %s270 = sand.u32 %s50, 1
          %s271 = scalar_lea.sflag [#allocation3], %s270
          %s272 = sand.u32 %s50, 1
          %s273 = smul.addr %s272, 16
          %s274 = scalar_lea.vmem [#allocation2], %s273
          %s275 = smul.u32 2, %s34
          %s277 = ssub.s32 256, 256
          %278 = vsyncadd %s271, %s277
          %s279 = smul.addr %s33, 2
          %s280 = sadd.s32 %s275, %s279
          %s281 = smul.addr %s280, 128
          %s282 = scalar_lea.hbm %s0, %s281
          %s283 = sshll.u32 %s274, 4
          %s284 = int_to_ptr.vmem [resolvable:$true] %s283
          %289 = dma.hbm_to_vmem [thread:$0]  %s282, 256, %s284, %s271, 128, 128, 8
        $region32: #{tpu_custom_call.1} parent=27 // pred_fallthru
          _
        // Predicated region
        $region33: #{tpu_custom_call.1} parent=27 // pred_check
          %p290 = pneg %p88
        $region34: #{tpu_custom_call.1} parent=27 // pred_check_branch
          %292 = sbr.rel (%p290) target = $region36
        $region35: #{tpu_custom_call.1} parent=27 // pred_region
          %s293 = sand.u32 %s26, 1
          %s294 = scalar_lea.sflag [#allocation6], %s293
          %s295 = sand.u32 %s78, 1
          %s296 = smul.addr %s295, 16
          %s297 = scalar_lea.vmem [#allocation5], %s296
          %s298 = smul.u32 2, %s34
          %s300 = ssub.s32 256, 256
          %301 = vsyncadd %s294, %s300
          %s302 = smul.addr %s33, 2
          %s303 = sadd.s32 %s298, %s302
          %s304 = smul.addr %s303, 128
          %s305 = scalar_lea.hbm %s1, %s304
          %s306 = sshll.u32 %s297, 4
          %s307 = int_to_ptr.vmem [resolvable:$true] %s306
          %312 = dma.hbm_to_vmem [thread:$0]  %s305, 256, %s307, %s294, 128, 128, 8
        $region36: #{tpu_custom_call.1} parent=27 // pred_fallthru
          _
      $region28: #{tpu_custom_call.1} parent=5 // pred_fallthru
        _
      %p313 = scmp.le.s32.totalorder 1, %s26
      %p314 = scmp.lt.s32.totalorder %s26, 3
      %p315 = pnand %p313, %p314
      %p316 = pneg %p315
      // Predicated region
      $region37: #{tpu_custom_call.1} parent=5 // pred_check
        _
      $region38: #{tpu_custom_call.1} parent=5 // pred_check_branch
        %318 = sbr.rel (%p315) target = $region40
      $region39: #{tpu_custom_call.1} parent=5 // pred_region
        %s319 = ssub.s32 %s26, 1
        %s320 = sand.u32 %s53, 1
        %s321 = scalar_lea.sflag [#allocation3], %s320
        %s322 = sand.u32 %s53, 1
        %s323 = smul.addr %s322, 16
        %s324 = scalar_lea.vmem [#allocation2], %s323
        // Predicated region
        $region41: #{tpu_custom_call.1} parent=39 // pred_check
          %p325 = pneg %p66
        $region42: #{tpu_custom_call.1} parent=39 // pred_check_branch
          %327 = sbr.rel (%p325) target = $region44
        $region43: #{tpu_custom_call.1} parent=39 // pred_region
          %328 = dma.done %s321, 256
        $region44: #{tpu_custom_call.1} parent=39 // pred_fallthru
          _
        %s329 = sand.u32 %s31, 1
        %s330 = scalar_lea.sflag [#allocation6], %s329
        %s331 = sand.u32 %s81, 1
        %s332 = smul.addr %s331, 16
        %s333 = scalar_lea.vmem [#allocation5], %s332
        // Predicated region
        $region45: #{tpu_custom_call.1} parent=39 // pred_check
          %p334 = pneg %p94
        $region46: #{tpu_custom_call.1} parent=39 // pred_check_branch
          %336 = sbr.rel (%p334) target = $region48
        $region47: #{tpu_custom_call.1} parent=39 // pred_region
          %337 = dma.done %s330, 256
        $region48: #{tpu_custom_call.1} parent=39 // pred_fallthru
          _
        // Predicated region
        $region49: #{tpu_custom_call.1} parent=39 // pred_check
          %p338 = pneg %p115
        $region50: #{tpu_custom_call.1} parent=39 // pred_check_branch
          %340 = sbr.rel (%p338) target = $region52
        $region51: #{tpu_custom_call.1} parent=39 // pred_region
          %341 = dma.done [#allocation6], 128
        $region52: #{tpu_custom_call.1} parent=39 // pred_fallthru
          _
        // Predicated region
        $region53: #{tpu_custom_call.1} parent=39 // pred_check
          %p342 = pneg %p136
        $region54: #{tpu_custom_call.1} parent=39 // pred_check_branch
          %344 = sbr.rel (%p342) target = $region56
        $region55: #{tpu_custom_call.1} parent=39 // pred_region
          %345 = dma.done [#allocation9], 16
        $region56: #{tpu_custom_call.1} parent=39 // pred_fallthru
          _
        // Predicated region
        $region57: #{tpu_custom_call.1} parent=39 // pred_check
          %p346 = pneg %p157
        $region58: #{tpu_custom_call.1} parent=39 // pred_check_branch
          %348 = sbr.rel (%p346) target = $region60
        $region59: #{tpu_custom_call.1} parent=39 // pred_region
          %349 = dma.done [#allocation9], 512
        $region60: #{tpu_custom_call.1} parent=39 // pred_fallthru
          _
        %s350 = sand.u32 %s53, 1
        %s351 = scalar_lea.sflag [#allocation3], %s350
        %s352 = sand.u32 %s53, 1
        %s353 = smul.addr %s352, 16
        %s354 = scalar_lea.vmem [#allocation2], %s353
        %p355 = pneg %p66
        %p356 = pneg %p63
        %s357 = sand.u32 %s31, 1
        %s358 = scalar_lea.sflag [#allocation6], %s357
        %s359 = sand.u32 %s81, 1
        %s360 = smul.addr %s359, 16
        %s361 = scalar_lea.vmem [#allocation5], %s360
        %p362 = pneg %p94
        %p363 = pneg %p91
        %p364 = pneg %p115
        %p365 = pneg %p112
        %p366 = pneg %p136
        %p367 = pneg %p133
        %p368 = pneg %p157
        %p369 = pneg %p154
        %p370 = pneg %p185
        %p371 = pneg %p182
        %s372 = sand.u32 %s172, 1
        %s373 = scalar_lea.sflag [#allocation4], %s372
        %s374 = sand.u32 %s172, 1
        %s375 = smul.addr %s374, 16
        %s376 = scalar_lea.vmem [#allocation11], %s375
        %p377 = pneg %p213
        %p378 = pneg %p210
        %s379 = sand.u32 %s200, 1
        %s380 = scalar_lea.sflag [#allocation13], %s379
        %s381 = sand.u32 %s200, 1
        %s382 = smul.addr %s381, 16
        %s383 = scalar_lea.vmem [#allocation12], %s382
        %s384 = smul.u32 2, %s36
        %s385 = smul.u32 2, %s36
        %s386 = smul.u32 2, %s36
        %s387 = smul.u32 2, %s36
        %v388 = vld [vmem:[%s324] sm:$0xff]
        %v389 = vld [vmem:[%s324 + $0x8] sm:$0xff]
        %v390 = vld [vmem:[%s333] sm:$0xff]
        %v391 = vld [vmem:[%s333 + $0x8] sm:$0xff]
        %v392 = vld [vmem:[#allocation10] sm:$0xff]
        %v393 = vld [vmem:[#allocation10 + $0x8] sm:$0xff]
        %v394 = vld [vmem:[#allocation10 + $0x10] sm:$0xff]
        %v395 = vld [vmem:[#allocation10 + $0x18] sm:$0xff]
        %vm396 = vcmask 261120
        %v398 = vsel %vm396, %v390, 0
        %v401 = vsel %vm396, %v391, 0
        %403 = vmatprep.subr.mxu0 0.0
        %404 = vmatpush1.msra.mxu0 %v392
        %405 = vmatprep.subr.mxu0 0.0
        %406 = vmatpush1.msra.mxu0 %v393
        %407 = vmatprep.subr.mxu0 0.0
        %408 = vmatpush1.msra.mxu0 %v394
        %409 = vmatprep.subr.mxu0 0.0
        %410 = vmatpush1.msra.mxu0 %v395
        %411 = vmatprep.subr.mxu0 0.0
        %412 = vmatpush1.msra.mxu0 0.0
        %413 = vmatprep.subr.mxu0 0.0
        %414 = vmatpush1.msra.mxu0 0.0
        %415 = vmatprep.subr.mxu0 0.0
        %416 = vmatpush1.msra.mxu0 0.0
        %417 = vmatprep.subr.mxu0 0.0
        %418 = vmatpush1.msra.mxu0 0.0
        %419 = vmatprep.subr.mxu0 0.0
        %420 = vmatpush1.msra.mxu0 0.0
        %421 = vmatprep.subr.mxu0 0.0
        %422 = vmatpush1.msra.mxu0 0.0
        %423 = vmatprep.subr.mxu0 0.0
        %424 = vmatpush1.msra.mxu0 0.0
        %425 = vmatprep.subr.mxu0 0.0
        %426 = vmatpush1.msra.mxu0 0.0
        %427 = vmatprep.subr.mxu0 0.0
        %428 = vmatpush1.msra.mxu0 0.0
        %429 = vmatprep.subr.mxu0 0.0
        %430 = vmatpush1.msra.mxu0 0.0
        %431 = vmatprep.subr.mxu0 0.0
        %432 = vmatpush1.msra.mxu0 0.0
        %433 = vmatprep.subr.mxu0 0.0
        %434 = vmatpush1.msra.mxu0 0.0
        %435 = vmatprep.subr.mxu0 0.0
        %436 = vmatpush1.msra.mxu0 0.0
        %437 = vmatprep.subr.mxu0 0.0
        %438 = vmatpush1.msra.mxu0 0.0
        %439 = vmatprep.subr.mxu0 0.0
        %440 = vmatpush1.msra.mxu0 0.0
        %441 = vmatprep.subr.mxu0 0.0
        %442 = vmatpush1.msra.mxu0 0.0
        %443 = vmatprep.subr.mxu0 0.0
        %444 = vmatpush1.msra.mxu0 0.0
        %445 = vmatprep.subr.mxu0 0.0
        %446 = vmatpush1.msra.mxu0 0.0
        %447 = vmatprep.subr.mxu0 0.0
        %448 = vmatpush1.msra.mxu0 0.0
        %449 = vmatprep.subr.mxu0 0.0
        %450 = vmatpush1.msra.mxu0 0.0
        %451 = vmatprep.subr.mxu0 0.0
        %452 = vmatpush1.msra.mxu0 0.0
        %453 = vmatprep.subr.mxu0 0.0
        %454 = vmatpush1.msra.mxu0 0.0
        %455 = vmatprep.subr.mxu0 0.0
        %456 = vmatpush1.msra.mxu0 0.0
        %457 = vmatprep.subr.mxu0 0.0
        %458 = vmatpush1.msra.mxu0 0.0
        %459 = vmatprep.subr.mxu0 0.0
        %460 = vmatpush1.msra.mxu0 0.0
        %461 = vmatprep.subr.mxu0 0.0
        %462 = vmatpush1.msra.mxu0 0.0
        %463 = vmatprep.subr.mxu0 0.0
        %464 = vmatpush1.msra.mxu0 0.0
        %465 = vmatprep.subr.mxu0 0.0
        %466 = vmatpush1.msra.mxu0 0.0
        %467 = vmatprep.mubr.f32.mxu0 0.0
        %468 = vmatmul.mubr.f32.gmra.mrb[0].mxu0 %v398
        %v469 = vpop.f32.mrb[0].mxu0
        %v470 = vadd.f32 0.0, %v469
        %v471 = vpop.f32.mrb[0].mxu0
        %472 = vmatprep.mubr.f32.mxu0 0.0
        %473 = vmatmul.mubr.f32.gmra.mrb[0].mxu0 %v401
        %v474 = vpop.f32.mrb[0].mxu0
        %v475 = vadd.f32 0.0, %v474
        %v476 = vpop.f32.mrb[0].mxu0
        %477 = vdwg.mxu0
        %v478 = vld [vmem:[#allocation7] sm:$0xff]
        %vm479 = vcmask 64512
        %v481 = vsel %vm479, %v388, 0
        %v484 = vsel %vm479, %v389, 0
        %486 = vmatprep.subr.mxu0 0.0
        %487 = vmatpush1.msra.mxu0 %v478
        %488 = vmatprep.subr.mxu0 0.0
        %489 = vmatpush1.msra.mxu0 0.0
        %490 = vmatprep.subr.mxu0 0.0
        %491 = vmatpush1.msra.mxu0 0.0
        %492 = vmatprep.subr.mxu0 0.0
        %493 = vmatpush1.msra.mxu0 0.0
        %494 = vmatprep.subr.mxu0 0.0
        %495 = vmatpush1.msra.mxu0 0.0
        %496 = vmatprep.subr.mxu0 0.0
        %497 = vmatpush1.msra.mxu0 0.0
        %498 = vmatprep.subr.mxu0 0.0
        %499 = vmatpush1.msra.mxu0 0.0
        %500 = vmatprep.subr.mxu0 0.0
        %501 = vmatpush1.msra.mxu0 0.0
        %502 = vmatprep.subr.mxu0 0.0
        %503 = vmatpush1.msra.mxu0 0.0
        %504 = vmatprep.subr.mxu0 0.0
        %505 = vmatpush1.msra.mxu0 0.0
        %506 = vmatprep.subr.mxu0 0.0
        %507 = vmatpush1.msra.mxu0 0.0
        %508 = vmatprep.subr.mxu0 0.0
        %509 = vmatpush1.msra.mxu0 0.0
        %510 = vmatprep.subr.mxu0 0.0
        %511 = vmatpush1.msra.mxu0 0.0
        %512 = vmatprep.subr.mxu0 0.0
        %513 = vmatpush1.msra.mxu0 0.0
        %514 = vmatprep.subr.mxu0 0.0
        %515 = vmatpush1.msra.mxu0 0.0
        %516 = vmatprep.subr.mxu0 0.0
        %517 = vmatpush1.msra.mxu0 0.0
        %518 = vmatprep.subr.mxu0 0.0
        %519 = vmatpush1.msra.mxu0 0.0
        %520 = vmatprep.subr.mxu0 0.0
        %521 = vmatpush1.msra.mxu0 0.0
        %522 = vmatprep.subr.mxu0 0.0
        %523 = vmatpush1.msra.mxu0 0.0
        %524 = vmatprep.subr.mxu0 0.0
        %525 = vmatpush1.msra.mxu0 0.0
        %526 = vmatprep.subr.mxu0 0.0
        %527 = vmatpush1.msra.mxu0 0.0
        %528 = vmatprep.subr.mxu0 0.0
        %529 = vmatpush1.msra.mxu0 0.0
        %530 = vmatprep.subr.mxu0 0.0
        %531 = vmatpush1.msra.mxu0 0.0
        %532 = vmatprep.subr.mxu0 0.0
        %533 = vmatpush1.msra.mxu0 0.0
        %534 = vmatprep.subr.mxu0 0.0
        %535 = vmatpush1.msra.mxu0 0.0
        %536 = vmatprep.subr.mxu0 0.0
        %537 = vmatpush1.msra.mxu0 0.0
        %538 = vmatprep.subr.mxu0 0.0
        %539 = vmatpush1.msra.mxu0 0.0
        %540 = vmatprep.subr.mxu0 0.0
        %541 = vmatpush1.msra.mxu0 0.0
        %542 = vmatprep.subr.mxu0 0.0
        %543 = vmatpush1.msra.mxu0 0.0
        %544 = vmatprep.subr.mxu0 0.0
        %545 = vmatpush1.msra.mxu0 0.0
        %546 = vmatprep.subr.mxu0 0.0
        %547 = vmatpush1.msra.mxu0 0.0
        %548 = vmatprep.subr.mxu0 0.0
        %549 = vmatpush1.msra.mxu0 0.0
        %550 = vmatprep.mubr.f32.mxu0 0.0
        %551 = vmatmul.mubr.f32.gmra.mrb[0].mxu0 %v481
        %v552 = vpop.f32.mrb[0].mxu0
        %v553 = vadd.f32 0.0, %v552
        %v554 = vpop.f32.mrb[0].mxu0
        %555 = vmatprep.mubr.f32.mxu0 0.0
        %556 = vmatmul.mubr.f32.gmra.mrb[0].mxu0 %v484
        %v557 = vpop.f32.mrb[0].mxu0
        %v558 = vadd.f32 0.0, %v557
        %v559 = vpop.f32.mrb[0].mxu0
        %560 = vdwg.mxu0
        %v561 = vld [vmem:[#allocation8] sm:$0x1]
        %v563 = vlaneseq
        %v564 = vshrl.u32 %v563, 7
        %v565 = vsub.s32 0, %v564
        %v566 = vrot.slane %v561, %v565
        %v568 = vsub.f32 %v566, %v553
        %v569 = vsub.f32 %v566, %v558
        %v570 = vmul.f32 %v553, %v470
        %v571 = vmul.f32 %v558, %v475
        %v572 = vmul.f32 %v568, %v470
        %v573 = vmul.f32 %v569, %v475
        %v574 = vmax.f32 %v570, 1e-07
        %v575 = vmax.f32 %v571, 1e-07
        %v576 = vlog2.pop %v574
        %v577 = vmul.f32 %v576, 0.6931472
        %v578 = vlog2.pop %v575
        %v579 = vmul.f32 %v578, 0.6931472
        %v580 = vmax.f32 %v572, 1e-07
        %v581 = vmax.f32 %v573, 1e-07
        %v582 = vlog2.pop %v580
        %v583 = vmul.f32 %v582, 0.6931472
        %v584 = vlog2.pop %v581
        %v585 = vmul.f32 %v584, 0.6931472
        %586 = vst [vmem:[%s376] sm:$0xff] %v577
        %587 = vst [vmem:[%s376 + $0x8] sm:$0xff] %v579
        %588 = vst [vmem:[%s383] sm:$0xff] %v583
        %589 = vst [vmem:[%s383 + $0x8] sm:$0xff] %v585
        %s590 = sand.u32 %s172, 1
        %s591 = scalar_lea.sflag [#allocation4], %s590
        %s592 = sand.u32 %s172, 1
        %s593 = smul.addr %s592, 16
        %s594 = scalar_lea.vmem [#allocation11], %s593
        %s595 = sand.u32 %s200, 1
        %s596 = scalar_lea.sflag [#allocation13], %s595
        %s597 = sand.u32 %s200, 1
        %s598 = smul.addr %s597, 16
        %s599 = scalar_lea.vmem [#allocation12], %s598
        // Predicated region
        $region61: #{tpu_custom_call.1} parent=39 // pred_check
          %p600 = pneg %p182
        $region62: #{tpu_custom_call.1} parent=39 // pred_check_branch
          %602 = sbr.rel (%p600) target = $region64
        $region63: #{tpu_custom_call.1} parent=39 // pred_region
          %s603 = smul.u32 2, %s36
          %s605 = ssub.s32 256, 256
          %606 = vsyncadd %s591, %s605
          %s607 = smul.addr %s35, 2
          %s608 = sadd.s32 %s603, %s607
          %s609 = smul.addr %s608, 128
          %s610 = scalar_lea.hbm %s5, %s609
          %s611 = sshll.u32 %s594, 4
          %s612 = int_to_ptr.vmem [resolvable:$true] %s611
          %617 = dma.vmem_to_hbm [thread:$0]  %s612, 256, %s610, %s591, 128, 128, 8
        $region64: #{tpu_custom_call.1} parent=39 // pred_fallthru
          _
        // Predicated region
        $region65: #{tpu_custom_call.1} parent=39 // pred_check
          %p618 = pneg %p210
        $region66: #{tpu_custom_call.1} parent=39 // pred_check_branch
          %620 = sbr.rel (%p618) target = $region68
        $region67: #{tpu_custom_call.1} parent=39 // pred_region
          %s621 = smul.u32 2, %s36
          %s623 = ssub.s32 256, 256
          %624 = vsyncadd %s596, %s623
          %s625 = smul.addr %s35, 2
          %s626 = sadd.s32 %s621, %s625
          %s627 = smul.addr %s626, 128
          %s628 = scalar_lea.hbm %s6, %s627
          %s629 = sshll.u32 %s599, 4
          %s630 = int_to_ptr.vmem [resolvable:$true] %s629
          %635 = dma.vmem_to_hbm [thread:$0]  %s630, 256, %s628, %s596, 128, 128, 8
        $region68: #{tpu_custom_call.1} parent=39 // pred_fallthru
          _
      $region40: #{tpu_custom_call.1} parent=5 // pred_fallthru
        _
      %p636 = scmp.le.s32.totalorder 2, %s26
      // Predicated region
      $region69: #{tpu_custom_call.1} parent=5 // pred_check
        %p637 = pneg %p636
      $region70: #{tpu_custom_call.1} parent=5 // pred_check_branch
        %639 = sbr.rel (%p637) target = $region72
      $region71: #{tpu_custom_call.1} parent=5 // pred_region
        %s640 = ssub.s32 %s26, 2
        // Predicated region
        $region73: #{tpu_custom_call.1} parent=71 // pred_check
          %p641 = pneg %p188
        $region74: #{tpu_custom_call.1} parent=71 // pred_check_branch
          %643 = sbr.rel (%p641) target = $region76
        $region75: #{tpu_custom_call.1} parent=71 // pred_region
          %s644 = sand.u32 %s173, 1
          %s645 = scalar_lea.sflag [#allocation4], %s644
          %s646 = sand.u32 %s173, 1
          %s647 = smul.addr %s646, 16
          %s648 = scalar_lea.vmem [#allocation11], %s647
          %649 = dma.done %s645, 256
        $region76: #{tpu_custom_call.1} parent=71 // pred_fallthru
          _
        // Predicated region
        $region77: #{tpu_custom_call.1} parent=71 // pred_check
          %p650 = pneg %p216
        $region78: #{tpu_custom_call.1} parent=71 // pred_check_branch
          %652 = sbr.rel (%p650) target = $region80
        $region79: #{tpu_custom_call.1} parent=71 // pred_region
          %s653 = sand.u32 %s201, 1
          %s654 = scalar_lea.sflag [#allocation13], %s653
          %s655 = sand.u32 %s201, 1
          %s656 = smul.addr %s655, 16
          %s657 = scalar_lea.vmem [#allocation12], %s656
          %658 = dma.done %s654, 256
        $region80: #{tpu_custom_call.1} parent=71 // pred_fallthru
          _
      $region72: #{tpu_custom_call.1} parent=5 // pred_fallthru
        _
    $region6: #{tpu_custom_call.1} parent=1 // loop_footer
      %s30 = sadd.s32 1, %s26
    $region7: #{tpu_custom_call.1} parent=1 // loop_footer_branch
      %25 = sbr.rel target = $region3
    $region8: #{tpu_custom_call.1} parent=1 // loop_exit
      _
    %659 = vsyncpa [#allocation3], 1
    %s660 = scalar_lea.sflag [#allocation3], 1
    %661 = vsyncpa %s660, 1
    %662 = vsyncpa [#allocation6], 1
    %s663 = scalar_lea.sflag [#allocation6], 1
    %664 = vsyncpa %s663, 1
    %665 = vsyncpa [#allocation9], 1
    %666 = vsyncpa [#allocation4], 1
    %s667 = scalar_lea.sflag [#allocation4], 1
    %668 = vsyncpa %s667, 1
    %669 = vsyncpa [#allocation13], 1
    %s670 = scalar_lea.sflag [#allocation13], 1
    %671 = vsyncpa %s670, 1

</llo_original>
